<compile_context>
chip_gen: v7x
topology: tpu7x:2x2x1
jax: 0.10.0
libtpu: 0.0.40
codegen_flags: <defaults>
</compile_context>

<pallas_src>
import jax
import jax.numpy as jnp
from jax import lax
from jax.experimental import pallas as pl
from jax.experimental.pallas import tpu as pltpu


# ----------------------------------------------------------------------------
# Pallas kernel: fused (pre-composed) head
#   out_tile = pooled @ W_tile + b_tile    (bf16 x bf16 -> f32 accumulate)
# ----------------------------------------------------------------------------
def _head_kernel(pooled_ref, w_ref, b_ref, out_ref):
    acc = jnp.dot(pooled_ref[...], w_ref[...],
                  preferred_element_type=jnp.float32)          # (Bp, TN) f32
    out_ref[...] = acc + b_ref[...].astype(jnp.float32)


def cu_predictor_head(pooled, w_comb, b_comb, num_class):
    """pooled: (B, 2048) f32; w_comb: (2048, lanes) bf16; b_comb: (1, lanes) bf16."""
    B, K = pooled.shape
    lanes = w_comb.shape[1]

    # Lane tiling: whole thing if small, 512-wide tiles for large num_class.
    TN = lanes if lanes <= 512 else 512
    assert lanes % TN == 0
    n_tiles = lanes // TN

    # Pad batch to a full 8-sublane vreg height (unmasked stores).
    Bp = ((B + 7) // 8) * 8
    pooled_p = jnp.pad(pooled, ((0, Bp - B), (0, 0))).astype(jnp.bfloat16)

    cost = pl.CostEstimate(
        flops=2 * Bp * K * lanes,
        transcendentals=0,
        bytes_accessed=(w_comb.size * 2 + b_comb.size * 2
                        + pooled_p.size * 2 + Bp * lanes * 4),
    )

    out = pl.pallas_call(
        _head_kernel,
        out_shape=jax.ShapeDtypeStruct((Bp, lanes), jnp.float32),
        grid_spec=pltpu.PrefetchScalarGridSpec(
            num_scalar_prefetch=0,
            grid=(n_tiles,),
            in_specs=[
                pl.BlockSpec((Bp, K), lambda j: (0, 0)),   # pooled: DMA'd once
                pl.BlockSpec((K, TN), lambda j: (0, j)),   # weight tile streams
                pl.BlockSpec((1, TN), lambda j: (0, j)),   # bias tile
            ],
            out_specs=pl.BlockSpec((Bp, TN), lambda j: (0, j)),
        ),
        compiler_params=pltpu.CompilerParams(
            dimension_semantics=("parallel",)),
        cost_estimate=cost,
    )(pooled_p, w_comb, b_comb)

    out = out[:B]
    predict_cls = out[:, :num_class]                              # (B, num_class)
    predict_height = jnp.maximum(out[:, num_class:num_class + 1], 0.0)  # (B, 1)
    return predict_cls, predict_height


def precompose_head(head_params, num_class):
    """Fold fc -> {classifier, height_regressor} into one (2048, lanes) matmul.

    Exact in math (fc has no activation); done once, outside the kernel.
    Result stored as bf16 (the kernel accumulates in f32 on the MXU).
    """
    (w_fc, b_fc), (w_cls, b_cls), (w_h, b_h) = head_params
    w_head = jnp.concatenate([w_cls, w_h], axis=1)       # (1024, num_class+1)
    b_head = jnp.concatenate([b_cls, b_h], axis=1)       # (1,    num_class+1)
    w_comb = w_fc @ w_head                               # (2048, num_class+1)
    b_comb = b_fc @ w_head + b_head                      # (1,    num_class+1)
    n_out = num_class + 1
    lanes = -(-n_out // 128) * 128                       # lane-dense multiple of 128
    if lanes > 512:
        lanes = -(-lanes // 512) * 512                   # tile-able by TN=512
    pad = lanes - n_out
    w_comb = jnp.pad(w_comb, ((0, 0), (0, pad)))
    b_comb = jnp.pad(b_comb, ((0, 0), (0, pad)))
    return w_comb.astype(jnp.bfloat16), b_comb.astype(jnp.bfloat16)


# ----------------------------------------------------------------------------
# Frozen ResNet50 trunk in plain JAX, TPU-native NHWC / HWIO layout.
# ----------------------------------------------------------------------------
def _conv(x, w, stride, padding):
    return lax.conv_general_dilated(
        x, w, window_strides=(stride, stride), padding=padding,
        dimension_numbers=('NHWC', 'HWIO', 'NHWC'))


def _bn(x, p):
    # eval-mode batchnorm (folded to per-channel scale + shift), channels-last.
    scale = p['gamma'] / jnp.sqrt(p['var'] + 1e-5)
    shift = p['beta'] - p['mean'] * scale
    return x * scale + shift


def _maxpool(x):
    return lax.reduce_window(x, -jnp.inf, lax.max,
                             (1, 3, 3, 1), (1, 2, 2, 1),
                             [(0, 0), (1, 1), (1, 1), (0, 0)])


class ParamGen:
    def __init__(self, seed=0):
        self.key = jax.random.PRNGKey(seed)

    def _next(self):
        self.key, k = jax.random.split(self.key)
        return k

    def conv(self, out_c, in_c, k):
        fan_in = in_c * k * k
        return jax.random.normal(self._next(), (k, k, in_c, out_c),
                                 jnp.float32) * jnp.sqrt(2.0 / fan_in)

    def bn(self, c):
        return dict(gamma=jnp.ones((c,), jnp.float32),
                    beta=jnp.zeros((c,), jnp.float32),
                    mean=jnp.zeros((c,), jnp.float32),
                    var=jnp.ones((c,), jnp.float32))

    def linear(self, in_f, out_f):
        w = jax.random.normal(self._next(), (in_f, out_f),
                              jnp.float32) / jnp.sqrt(in_f)
        b = jnp.zeros((1, out_f), jnp.float32)
        return w, b


def _init_bottleneck(pg, inplanes, planes, stride):
    p = {'stride': stride}
    p['c1'] = pg.conv(planes, inplanes, 1)
    p['b1'] = pg.bn(planes)
    p['c2'] = pg.conv(planes, planes, 3)
    p['b2'] = pg.bn(planes)
    p['c3'] = pg.conv(planes * 4, planes, 1)
    p['b3'] = pg.bn(planes * 4)
    if stride != 1 or inplanes != planes * 4:
        p['cd'] = pg.conv(planes * 4, inplanes, 1)
        p['bd'] = pg.bn(planes * 4)
    return p


def _bottleneck_fwd(x, p):
    s = p['stride']
    out = jax.nn.relu(_bn(_conv(x, p['c1'], 1, 'VALID'), p['b1']))
    out = jax.nn.relu(_bn(_conv(out, p['c2'], s, [(1, 1), (1, 1)]), p['b2']))
    out = _bn(_conv(out, p['c3'], 1, 'VALID'), p['b3'])
    if 'cd' in p:
        identity = _bn(_conv(x, p['cd'], s, 'VALID'), p['bd'])
    else:
        identity = x
    return jax.nn.relu(out + identity)


def init_resnet50_backbone(pg):
    params = {'conv1': pg.conv(64, 3, 7), 'bn1': pg.bn(64)}
    cfg = [(64, 3, 1), (128, 4, 2), (256, 6, 2), (512, 3, 2)]
    inplanes = 64
    layers = []
    for planes, n_blocks, stride in cfg:
        layer = []
        for i in range(n_blocks):
            s = stride if i == 0 else 1
            layer.append(_init_bottleneck(pg, inplanes, planes, s))
            inplanes = planes * 4
        layers.append(layer)
    params['layers'] = layers
    return params, inplanes          # inplanes == 2048 == fc.in_features


def resnet50_features(x_nchw, params):
    # Accepts NCHW (like PyTorch), runs the trunk in NHWC, returns NHWC features.
    x = jnp.transpose(x_nchw, (0, 2, 3, 1))                 # -> NHWC once
    x = _conv(x, params['conv1'], 2, [(3, 3), (3, 3)])
    x = jax.nn.relu(_bn(x, params['bn1']))
    x = _maxpool(x)
    for layer in params['layers']:
        for blk in layer:
            x = _bottleneck_fwd(x, blk)
    return x                                                # (B, Hf, Wf, 2048)


# ----------------------------------------------------------------------------
# Full CUPredictor forward.
# ----------------------------------------------------------------------------
def cu_predictor_forward(input_img, backbone_params, composed_head, num_class):
    feats = resnet50_features(input_img, backbone_params)   # (B, Hf, Wf, 2048)
    pooled = jnp.mean(feats, axis=(1, 2))                   # adaptive avg pool -> (B, 2048)
    w_comb, b_comb = composed_head
    return cu_predictor_head(pooled, w_comb, b_comb, num_class)


def _assert_close(a, b, tol=5e-2):
    # bf16 head weights: compare with tolerance relative to the reference scale.
    scale = max(float(jnp.max(jnp.abs(b))), 1.0)
    err = float(jnp.max(jnp.abs(a - b)))
    assert err <= tol * scale, (err, scale)


if __name__ == "__main__":
    num_class = 2
    B, Cin, H, W = 2, 3, 64, 64            # small image, 3-channel (resnet stem)

    pg = ParamGen(seed=0)
    backbone_params, num_ftrs = init_resnet50_backbone(pg)   # num_ftrs = 2048
    head_params = (pg.linear(num_ftrs, num_ftrs // 2),        # base.fc
                   pg.linear(num_ftrs // 2, num_class),       # classifier
                   pg.linear(num_ftrs // 2, 1))               # height_regressor
    composed_head = precompose_head(head_params, num_class)   # done once, bf16

    input_img = jax.random.normal(jax.random.PRNGKey(0), (B, Cin, H, W),
                                  jnp.float32)

    predict_cls, predict_height = cu_predictor_forward(
        input_img, backbone_params, composed_head, num_class)
    jax.block_until_ready((predict_cls, predict_height))

    # Correctness check of the fused Pallas head against a plain-JAX f32
    # reference implementing the original two-matmul PyTorch head.
    feats = resnet50_features(input_img, backbone_params)
    pooled = jnp.mean(feats, axis=(1, 2))
    (w_fc, b_fc), (w_cls, b_cls), (w_h, b_h) = head_params
    hid_ref = pooled @ w_fc + b_fc
    cls_ref = hid_ref @ w_cls + b_cls
    h_ref = jnp.maximum(hid_ref @ w_h + b_h, 0.0)
    assert predict_cls.shape == (B, num_class) and predict_height.shape == (B, 1)
    _assert_close(predict_cls, cls_ref)
    _assert_close(predict_height, h_ref)

    print("KERNEL_OK")
</pallas_src>

<mosaic_0001>
module attributes {stable_mosaic.version = 11 : i64} {
  func.func @_head_kernel(%arg0: i32, %arg1: memref<8x2048xbf16, #tpu.memory_space<vmem>>, %arg2: memref<2048x128xbf16, #tpu.memory_space<vmem>>, %arg3: memref<1x128xbf16, #tpu.memory_space<vmem>>, %arg4: memref<8x128xf32, #tpu.memory_space<vmem>>) attributes {dimension_semantics = [#tpu.dimension_semantics<parallel>], iteration_bounds = array<i64: 1>, scalar_prefetch = 0 : i64, scratch_operands = 0 : i64, tpu.core_type = #tpu.core_type<tc>, window_params = [{pipeline_mode = #tpu.pipeline_mode<synchronous>, transform_indices = @transform_0, window_bounds = array<i64: 8, 2048>}, {transform_indices = @transform_1, window_bounds = array<i64: 2048, 128>}, {transform_indices = @transform_2, window_bounds = array<i64: 1, 128>}, {transform_indices = @transform_3, window_bounds = array<i64: 8, 128>}]} {
    %c0 = arith.constant 0 : index
    %c0_0 = arith.constant 0 : index
    %0 = vector.load %arg1[%c0, %c0_0] : memref<8x2048xbf16, #tpu.memory_space<vmem>>, vector<8x2048xbf16>
    %c0_1 = arith.constant 0 : index
    %c0_2 = arith.constant 0 : index
    %1 = vector.load %arg2[%c0_1, %c0_2] : memref<2048x128xbf16, #tpu.memory_space<vmem>>, vector<2048x128xbf16>
    %cst = arith.constant dense<0.000000e+00> : vector<8x128xf32>
    %2 = tpu.matmul %0, %1, %cst {dimension_numbers = #tpu.dot_dimension_numbers<[1], [0], [0], [1], [0, 0, 1, 1], [], []>} : vector<8x2048xbf16>, vector<2048x128xbf16>, vector<8x128xf32> -> vector<8x128xf32>
    %c0_3 = arith.constant 0 : index
    %c0_4 = arith.constant 0 : index
    %3 = vector.load %arg3[%c0_3, %c0_4] : memref<1x128xbf16, #tpu.memory_space<vmem>>, vector<1x128xbf16>
    %4 = arith.extf %3 : vector<1x128xbf16> to vector<1x128xf32>
    %5 = vector.broadcast %4 : vector<1x128xf32> to vector<8x128xf32>
    %6 = arith.addf %2, %5 : vector<8x128xf32>
    %c0_5 = arith.constant 0 : index
    %c0_6 = arith.constant 0 : index
    %7 = vector.load %arg4[%c0_5, %c0_6] : memref<8x128xf32, #tpu.memory_space<vmem>>, vector<8x128xf32>
    tpu.vector_store %arg4[%c0_5, %c0_6], %6 {strides = array<i32>} : memref<8x128xf32, #tpu.memory_space<vmem>>, vector<8x128xf32>,
    return
  }
  func.func @transform_0(%arg0: i32) -> (i32, i32) {
    %c0_i32 = arith.constant 0 : i32
    %c0_i32_0 = arith.constant 0 : i32
    %c0_i32_1 = arith.constant 0 : i32
    return %c0_i32, %c0_i32_0 : i32, i32
  }
  func.func @transform_1(%arg0: i32) -> (i32, i32) {
    %c0_i32 = arith.constant 0 : i32
    %c0_i32_0 = arith.constant 0 : i32
    return %c0_i32, %arg0 : i32, i32
  }
  func.func @transform_2(%arg0: i32) -> (i32, i32) {
    %c0_i32 = arith.constant 0 : i32
    %c0_i32_0 = arith.constant 0 : i32
    return %c0_i32, %arg0 : i32, i32
  }
  func.func @transform_3(%arg0: i32) -> (i32, i32) {
    %c0_i32 = arith.constant 0 : i32
    %c0_i32_0 = arith.constant 0 : i32
    return %c0_i32, %arg0 : i32, i32
  }
}

</mosaic_0001>

<llo_original>
// kernel: tpu_custom_call.1
$region0: #{tpu_custom_call.1}
  #allocation0 [shape = 'u32[]', space=smem, size = 0x4, offset = 0x4, fixed_abs, tag = 'smem constant byte address 0x4 - core index']
  #allocation1 [shape = 'u32[144,128]{1,0:T(1,128)}', space=vmem, size = 0x12000, scoped, tag = 'internal scratch']
  %s0 = inlined_call_operand.hbm [shape: bf16[8,2048], index: 0, kind: input, shape index: {}]
  %s1 = inlined_call_operand.hbm [shape: bf16[2048,128], index: 1, kind: input, shape index: {}]
  %s2 = inlined_call_operand.vmem [shape: bf16[1,128], index: 2, kind: input, shape index: {}]
  %s3 = inlined_call_operand.hbm [shape: f32[8,128], index: 3, kind: output, shape index: {}]
  %s4 = sld [smem:[#allocation0]]
  $region30: #{tpu_custom_call.1} parent=0
    _
  %s6 = ssub.s32 1, %s4
  %s7 = scalar_select 0, %s6, %s4
  $region1: #{tpu_custom_call.1} parent=0
    #allocation2 [shape = 'u8[32768]{0}', space=vmem, size = 0x8000, scoped, tag = 'input window, operand 0, single buffered']
    #allocation3 [shape = 's32[1]{0}', space=sflag, size = 0x4, scoped, tag = 'scoped memory for tpu_custom_call.1']
    #allocation4 [shape = 's32[1]{0}', space=sflag, size = 0x4, scoped, tag = 'scoped memory for tpu_custom_call.1']
    #allocation5 [shape = 'u8[524288]{0}', space=vmem, size = 0x80000, scoped, tag = 'input window, operand 1, single buffered']
    #allocation6 [shape = 's32[1]{0}', space=sflag, size = 0x4, scoped, tag = 'scoped memory for tpu_custom_call.1']
    #allocation7 [shape = 'u8[4096]{0}', space=vmem, size = 0x1000, scoped, tag = 'output window, operand 0, single buffered']
    %8 = vsyncpa [#allocation3], 0
    %9 = vsyncpa [#allocation6], 0
    %10 = vsyncpa [#allocation4], 0
    // Predicated region
    $region2: #{tpu_custom_call.1} parent=1 // pred_check
      _
    $region3: #{tpu_custom_call.1} parent=1 // pred_check_branch
      %12 = sbr.rel (0) target = $region5
    $region4: #{tpu_custom_call.1} parent=1 // pred_region
      %s14 = ssub.s32 1024, 1024
      %15 = vsyncadd [#allocation3], %s14
      %s17 = sshll.u32 [#allocation2], 4
      %s18 = int_to_ptr.vmem [resolvable:$true] %s17
      %20 = dma.hbm_to_vmem [thread:$0]  %s0, 1024, %s18, [#allocation3]
    $region5: #{tpu_custom_call.1} parent=1 // pred_fallthru
      _
    // Predicated region
    $region6: #{tpu_custom_call.1} parent=1 // pred_check
      _
    $region7: #{tpu_custom_call.1} parent=1 // pred_check_branch
      %22 = sbr.rel (0) target = $region9
    $region8: #{tpu_custom_call.1} parent=1 // pred_region
      %s24 = ssub.s32 16384, 16384
      %25 = vsyncadd [#allocation6], %s24
      %s26 = sshll.u32 [#allocation5], 4
      %s27 = int_to_ptr.vmem [resolvable:$true] %s26
      %32 = dma.hbm_to_vmem [thread:$0]  %s1, 16384, %s27, [#allocation6], 64, 64, 4
    $region9: #{tpu_custom_call.1} parent=1 // pred_fallthru
      _
    // Predicated region
    $region10: #{tpu_custom_call.1} parent=1 // pred_check
      _
    $region11: #{tpu_custom_call.1} parent=1 // pred_check_branch
      %34 = sbr.rel (0) target = $region13
    $region12: #{tpu_custom_call.1} parent=1 // pred_region
      _
    $region13: #{tpu_custom_call.1} parent=1 // pred_fallthru
      _
    // Predicated region
    $region14: #{tpu_custom_call.1} parent=1 // pred_check
      _
    $region15: #{tpu_custom_call.1} parent=1 // pred_check_branch
      %36 = sbr.rel (0) target = $region17
    $region16: #{tpu_custom_call.1} parent=1 // pred_region
      %37 = dma.done [#allocation3], 1024
    $region17: #{tpu_custom_call.1} parent=1 // pred_fallthru
      _
    // Predicated region
    $region18: #{tpu_custom_call.1} parent=1 // pred_check
      _
    $region19: #{tpu_custom_call.1} parent=1 // pred_check_branch
      %39 = sbr.rel (0) target = $region21
    $region20: #{tpu_custom_call.1} parent=1 // pred_region
      %40 = dma.done [#allocation6], 16384
    $region21: #{tpu_custom_call.1} parent=1 // pred_fallthru
      _
    %v42 = vld [vmem:[#allocation2] sm:$0xff]
    %v43 = vld [vmem:[#allocation2 + $0x8] sm:$0xff]
    %v44 = vld [vmem:[#allocation2 + $0x10] sm:$0xff]
    %v45 = vld [vmem:[#allocation2 + $0x18] sm:$0xff]
    %v46 = vld [vmem:[#allocation2 + $0x20] sm:$0xff]
    %v47 = vld [vmem:[#allocation2 + $0x28] sm:$0xff]
    %v48 = vld [vmem:[#allocation2 + $0x30] sm:$0xff]
    %v49 = vld [vmem:[#allocation2 + $0x38] sm:$0xff]
    %v50 = vld [vmem:[#allocation5] sm:$0xf]
    %v51 = vld [vmem:[#allocation5 + $0x4] sm:$0xf]
    %v52 = vld [vmem:[#allocation5 + $0x8] sm:$0xf]
    %v53 = vld [vmem:[#allocation5 + $0xc] sm:$0xf]
    %v54 = vld [vmem:[#allocation5 + $0x10] sm:$0xf]
    %v55 = vld [vmem:[#allocation5 + $0x14] sm:$0xf]
    %v56 = vld [vmem:[#allocation5 + $0x18] sm:$0xf]
    %v57 = vld [vmem:[#allocation5 + $0x1c] sm:$0xf]
    %v58 = vld [vmem:[#allocation5 + $0x20] sm:$0xf]
    %v59 = vld [vmem:[#allocation5 + $0x24] sm:$0xf]
    %v60 = vld [vmem:[#allocation5 + $0x28] sm:$0xf]
    %v61 = vld [vmem:[#allocation5 + $0x2c] sm:$0xf]
    %v62 = vld [vmem:[#allocation5 + $0x30] sm:$0xf]
    %v63 = vld [vmem:[#allocation5 + $0x34] sm:$0xf]
    %v64 = vld [vmem:[#allocation5 + $0x38] sm:$0xf]
    %v65 = vld [vmem:[#allocation5 + $0x3c] sm:$0xf]
    %v66 = vld [vmem:[#allocation5 + $0x40] sm:$0xf]
    %v67 = vld [vmem:[#allocation5 + $0x44] sm:$0xf]
    %v68 = vld [vmem:[#allocation5 + $0x48] sm:$0xf]
    %v69 = vld [vmem:[#allocation5 + $0x4c] sm:$0xf]
    %v70 = vld [vmem:[#allocation5 + $0x50] sm:$0xf]
    %v71 = vld [vmem:[#allocation5 + $0x54] sm:$0xf]
    %v72 = vld [vmem:[#allocation5 + $0x58] sm:$0xf]
    %v73 = vld [vmem:[#allocation5 + $0x5c] sm:$0xf]
    %v74 = vld [vmem:[#allocation5 + $0x60] sm:$0xf]
    %v75 = vld [vmem:[#allocation5 + $0x64] sm:$0xf]
    %v76 = vld [vmem:[#allocation5 + $0x68] sm:$0xf]
    %v77 = vld [vmem:[#allocation5 + $0x6c] sm:$0xf]
    %v78 = vld [vmem:[#allocation5 + $0x70] sm:$0xf]
    %v79 = vld [vmem:[#allocation5 + $0x74] sm:$0xf]
    %v80 = vld [vmem:[#allocation5 + $0x78] sm:$0xf]
    %v81 = vld [vmem:[#allocation5 + $0x7c] sm:$0xf]
    %v82 = vld [vmem:[#allocation5 + $0x80] sm:$0xf]
    %v83 = vld [vmem:[#allocation5 + $0x84] sm:$0xf]
    %v84 = vld [vmem:[#allocation5 + $0x88] sm:$0xf]
    %v85 = vld [vmem:[#allocation5 + $0x8c] sm:$0xf]
    %v86 = vld [vmem:[#allocation5 + $0x90] sm:$0xf]
    %v87 = vld [vmem:[#allocation5 + $0x94] sm:$0xf]
    %v88 = vld [vmem:[#allocation5 + $0x98] sm:$0xf]
    %v89 = vld [vmem:[#allocation5 + $0x9c] sm:$0xf]
    %v90 = vld [vmem:[#allocation5 + $0xa0] sm:$0xf]
    %v91 = vld [vmem:[#allocation5 + $0xa4] sm:$0xf]
    %v92 = vld [vmem:[#allocation5 + $0xa8] sm:$0xf]
    %v93 = vld [vmem:[#allocation5 + $0xac] sm:$0xf]
    %v94 = vld [vmem:[#allocation5 + $0xb0] sm:$0xf]
    %v95 = vld [vmem:[#allocation5 + $0xb4] sm:$0xf]
    %v96 = vld [vmem:[#allocation5 + $0xb8] sm:$0xf]
    %v97 = vld [vmem:[#allocation5 + $0xbc] sm:$0xf]
    %v98 = vld [vmem:[#allocation5 + $0xc0] sm:$0xf]
    %v99 = vld [vmem:[#allocation5 + $0xc4] sm:$0xf]
    %v100 = vld [vmem:[#allocation5 + $0xc8] sm:$0xf]
    %v101 = vld [vmem:[#allocation5 + $0xcc] sm:$0xf]
    %v102 = vld [vmem:[#allocation5 + $0xd0] sm:$0xf]
    %v103 = vld [vmem:[#allocation5 + $0xd4] sm:$0xf]
    %v104 = vld [vmem:[#allocation5 + $0xd8] sm:$0xf]
    %v105 = vld [vmem:[#allocation5 + $0xdc] sm:$0xf]
    %v106 = vld [vmem:[#allocation5 + $0xe0] sm:$0xf]
    %v107 = vld [vmem:[#allocation5 + $0xe4] sm:$0xf]
    %v108 = vld [vmem:[#allocation5 + $0xe8] sm:$0xf]
    %v109 = vld [vmem:[#allocation5 + $0xec] sm:$0xf]
    %v110 = vld [vmem:[#allocation5 + $0xf0] sm:$0xf]
    %v111 = vld [vmem:[#allocation5 + $0xf4] sm:$0xf]
    %v112 = vld [vmem:[#allocation5 + $0xf8] sm:$0xf]
    %v113 = vld [vmem:[#allocation5 + $0xfc] sm:$0xf]
    %v114 = vld [vmem:[#allocation5 + $0x100] sm:$0xf]
    %v115 = vld [vmem:[#allocation5 + $0x104] sm:$0xf]
    %v116 = vld [vmem:[#allocation5 + $0x108] sm:$0xf]
    %v117 = vld [vmem:[#allocation5 + $0x10c] sm:$0xf]
    %v118 = vld [vmem:[#allocation5 + $0x110] sm:$0xf]
    %v119 = vld [vmem:[#allocation5 + $0x114] sm:$0xf]
    %v120 = vld [vmem:[#allocation5 + $0x118] sm:$0xf]
    %v121 = vld [vmem:[#allocation5 + $0x11c] sm:$0xf]
    %v122 = vld [vmem:[#allocation5 + $0x120] sm:$0xf]
    %v123 = vld [vmem:[#allocation5 + $0x124] sm:$0xf]
    %v124 = vld [vmem:[#allocation5 + $0x128] sm:$0xf]
    %v125 = vld [vmem:[#allocation5 + $0x12c] sm:$0xf]
    %v126 = vld [vmem:[#allocation5 + $0x130] sm:$0xf]
    %v127 = vld [vmem:[#allocation5 + $0x134] sm:$0xf]
    %v128 = vld [vmem:[#allocation5 + $0x138] sm:$0xf]
    %v129 = vld [vmem:[#allocation5 + $0x13c] sm:$0xf]
    %v130 = vld [vmem:[#allocation5 + $0x140] sm:$0xf]
    %v131 = vld [vmem:[#allocation5 + $0x144] sm:$0xf]
    %v132 = vld [vmem:[#allocation5 + $0x148] sm:$0xf]
    %v133 = vld [vmem:[#allocation5 + $0x14c] sm:$0xf]
    %v134 = vld [vmem:[#allocation5 + $0x150] sm:$0xf]
    %v135 = vld [vmem:[#allocation5 + $0x154] sm:$0xf]
    %v136 = vld [vmem:[#allocation5 + $0x158] sm:$0xf]
    %v137 = vld [vmem:[#allocation5 + $0x15c] sm:$0xf]
    %v138 = vld [vmem:[#allocation5 + $0x160] sm:$0xf]
    %v139 = vld [vmem:[#allocation5 + $0x164] sm:$0xf]
    %v140 = vld [vmem:[#allocation5 + $0x168] sm:$0xf]
    %v141 = vld [vmem:[#allocation5 + $0x16c] sm:$0xf]
    %v142 = vld [vmem:[#allocation5 + $0x170] sm:$0xf]
    %v143 = vld [vmem:[#allocation5 + $0x174] sm:$0xf]
    %v144 = vld [vmem:[#allocation5 + $0x178] sm:$0xf]
    %v145 = vld [vmem:[#allocation5 + $0x17c] sm:$0xf]
    %v146 = vld [vmem:[#allocation5 + $0x180] sm:$0xf]
    %v147 = vld [vmem:[#allocation5 + $0x184] sm:$0xf]
    %v148 = vld [vmem:[#allocation5 + $0x188] sm:$0xf]
    %v149 = vld [vmem:[#allocation5 + $0x18c] sm:$0xf]
    %v150 = vld [vmem:[#allocation5 + $0x190] sm:$0xf]
    %v151 = vld [vmem:[#allocation5 + $0x194] sm:$0xf]
    %v152 = vld [vmem:[#allocation5 + $0x198] sm:$0xf]
    %v153 = vld [vmem:[#allocation5 + $0x19c] sm:$0xf]
    %v154 = vld [vmem:[#allocation5 + $0x1a0] sm:$0xf]
    %v155 = vld [vmem:[#allocation5 + $0x1a4] sm:$0xf]
    %v156 = vld [vmem:[#allocation5 + $0x1a8] sm:$0xf]
    %v157 = vld [vmem:[#allocation5 + $0x1ac] sm:$0xf]
    %v158 = vld [vmem:[#allocation5 + $0x1b0] sm:$0xf]
    %v159 = vld [vmem:[#allocation5 + $0x1b4] sm:$0xf]
    %v160 = vld [vmem:[#allocation5 + $0x1b8] sm:$0xf]
    %v161 = vld [vmem:[#allocation5 + $0x1bc] sm:$0xf]
    %v162 = vld [vmem:[#allocation5 + $0x1c0] sm:$0xf]
    %v163 = vld [vmem:[#allocation5 + $0x1c4] sm:$0xf]
    %v164 = vld [vmem:[#allocation5 + $0x1c8] sm:$0xf]
    %v165 = vld [vmem:[#allocation5 + $0x1cc] sm:$0xf]
    %v166 = vld [vmem:[#allocation5 + $0x1d0] sm:$0xf]
    %v167 = vld [vmem:[#allocation5 + $0x1d4] sm:$0xf]
    %v168 = vld [vmem:[#allocation5 + $0x1d8] sm:$0xf]
    %v169 = vld [vmem:[#allocation5 + $0x1dc] sm:$0xf]
    %v170 = vld [vmem:[#allocation5 + $0x1e0] sm:$0xf]
    %v171 = vld [vmem:[#allocation5 + $0x1e4] sm:$0xf]
    %v172 = vld [vmem:[#allocation5 + $0x1e8] sm:$0xf]
    %v173 = vld [vmem:[#allocation5 + $0x1ec] sm:$0xf]
    %v174 = vld [vmem:[#allocation5 + $0x1f0] sm:$0xf]
    %v175 = vld [vmem:[#allocation5 + $0x1f4] sm:$0xf]
    %v176 = vld [vmem:[#allocation5 + $0x1f8] sm:$0xf]
    %v177 = vld [vmem:[#allocation5 + $0x1fc] sm:$0xf]
    %v178 = vld [vmem:[#allocation5 + $0x200] sm:$0xf]
    %v179 = vld [vmem:[#allocation5 + $0x204] sm:$0xf]
    %v180 = vld [vmem:[#allocation5 + $0x208] sm:$0xf]
    %v181 = vld [vmem:[#allocation5 + $0x20c] sm:$0xf]
    %v182 = vld [vmem:[#allocation5 + $0x210] sm:$0xf]
    %v183 = vld [vmem:[#allocation5 + $0x214] sm:$0xf]
    %v184 = vld [vmem:[#allocation5 + $0x218] sm:$0xf]
    %v185 = vld [vmem:[#allocation5 + $0x21c] sm:$0xf]
    %v186 = vld [vmem:[#allocation5 + $0x220] sm:$0xf]
    %v187 = vld [vmem:[#allocation5 + $0x224] sm:$0xf]
    %v188 = vld [vmem:[#allocation5 + $0x228] sm:$0xf]
    %v189 = vld [vmem:[#allocation5 + $0x22c] sm:$0xf]
    %v190 = vld [vmem:[#allocation5 + $0x230] sm:$0xf]
    %v191 = vld [vmem:[#allocation5 + $0x234] sm:$0xf]
    %v192 = vld [vmem:[#allocation5 + $0x238] sm:$0xf]
    %v193 = vld [vmem:[#allocation5 + $0x23c] sm:$0xf]
    %v194 = vld [vmem:[#allocation5 + $0x240] sm:$0xf]
    %v195 = vld [vmem:[#allocation5 + $0x244] sm:$0xf]
    %v196 = vld [vmem:[#allocation5 + $0x248] sm:$0xf]
    %v197 = vld [vmem:[#allocation5 + $0x24c] sm:$0xf]
    %v198 = vld [vmem:[#allocation5 + $0x250] sm:$0xf]
    %v199 = vld [vmem:[#allocation5 + $0x254] sm:$0xf]
    %v200 = vld [vmem:[#allocation5 + $0x258] sm:$0xf]
    %v201 = vld [vmem:[#allocation5 + $0x25c] sm:$0xf]
    %v202 = vld [vmem:[#allocation5 + $0x260] sm:$0xf]
    %v203 = vld [vmem:[#allocation5 + $0x264] sm:$0xf]
    %v204 = vld [vmem:[#allocation5 + $0x268] sm:$0xf]
    %v205 = vld [vmem:[#allocation5 + $0x26c] sm:$0xf]
    %v206 = vld [vmem:[#allocation5 + $0x270] sm:$0xf]
    %v207 = vld [vmem:[#allocation5 + $0x274] sm:$0xf]
    %v208 = vld [vmem:[#allocation5 + $0x278] sm:$0xf]
    %v209 = vld [vmem:[#allocation5 + $0x27c] sm:$0xf]
    %v210 = vld [vmem:[#allocation5 + $0x280] sm:$0xf]
    %v211 = vld [vmem:[#allocation5 + $0x284] sm:$0xf]
    %v212 = vld [vmem:[#allocation5 + $0x288] sm:$0xf]
    %v213 = vld [vmem:[#allocation5 + $0x28c] sm:$0xf]
    %v214 = vld [vmem:[#allocation5 + $0x290] sm:$0xf]
    %v215 = vld [vmem:[#allocation5 + $0x294] sm:$0xf]
    %v216 = vld [vmem:[#allocation5 + $0x298] sm:$0xf]
    %v217 = vld [vmem:[#allocation5 + $0x29c] sm:$0xf]
    %v218 = vld [vmem:[#allocation5 + $0x2a0] sm:$0xf]
    %v219 = vld [vmem:[#allocation5 + $0x2a4] sm:$0xf]
    %v220 = vld [vmem:[#allocation5 + $0x2a8] sm:$0xf]
    %v221 = vld [vmem:[#allocation5 + $0x2ac] sm:$0xf]
    %v222 = vld [vmem:[#allocation5 + $0x2b0] sm:$0xf]
    %v223 = vld [vmem:[#allocation5 + $0x2b4] sm:$0xf]
    %v224 = vld [vmem:[#allocation5 + $0x2b8] sm:$0xf]
    %v225 = vld [vmem:[#allocation5 + $0x2bc] sm:$0xf]
    %v226 = vld [vmem:[#allocation5 + $0x2c0] sm:$0xf]
    %v227 = vld [vmem:[#allocation5 + $0x2c4] sm:$0xf]
    %v228 = vld [vmem:[#allocation5 + $0x2c8] sm:$0xf]
    %v229 = vld [vmem:[#allocation5 + $0x2cc] sm:$0xf]
    %v230 = vld [vmem:[#allocation5 + $0x2d0] sm:$0xf]
    %v231 = vld [vmem:[#allocation5 + $0x2d4] sm:$0xf]
    %v232 = vld [vmem:[#allocation5 + $0x2d8] sm:$0xf]
    %v233 = vld [vmem:[#allocation5 + $0x2dc] sm:$0xf]
    %v234 = vld [vmem:[#allocation5 + $0x2e0] sm:$0xf]
    %v235 = vld [vmem:[#allocation5 + $0x2e4] sm:$0xf]
    %v236 = vld [vmem:[#allocation5 + $0x2e8] sm:$0xf]
    %v237 = vld [vmem:[#allocation5 + $0x2ec] sm:$0xf]
    %v238 = vld [vmem:[#allocation5 + $0x2f0] sm:$0xf]
    %v239 = vld [vmem:[#allocation5 + $0x2f4] sm:$0xf]
    %v240 = vld [vmem:[#allocation5 + $0x2f8] sm:$0xf]
    %v241 = vld [vmem:[#allocation5 + $0x2fc] sm:$0xf]
    %v242 = vld [vmem:[#allocation5 + $0x300] sm:$0xf]
    %v243 = vld [vmem:[#allocation5 + $0x304] sm:$0xf]
    %v244 = vld [vmem:[#allocation5 + $0x308] sm:$0xf]
    %v245 = vld [vmem:[#allocation5 + $0x30c] sm:$0xf]
    %v246 = vld [vmem:[#allocation5 + $0x310] sm:$0xf]
    %v247 = vld [vmem:[#allocation5 + $0x314] sm:$0xf]
    %v248 = vld [vmem:[#allocation5 + $0x318] sm:$0xf]
    %v249 = vld [vmem:[#allocation5 + $0x31c] sm:$0xf]
    %v250 = vld [vmem:[#allocation5 + $0x320] sm:$0xf]
    %v251 = vld [vmem:[#allocation5 + $0x324] sm:$0xf]
    %v252 = vld [vmem:[#allocation5 + $0x328] sm:$0xf]
    %v253 = vld [vmem:[#allocation5 + $0x32c] sm:$0xf]
    %v254 = vld [vmem:[#allocation5 + $0x330] sm:$0xf]
    %v255 = vld [vmem:[#allocation5 + $0x334] sm:$0xf]
    %v256 = vld [vmem:[#allocation5 + $0x338] sm:$0xf]
    %v257 = vld [vmem:[#allocation5 + $0x33c] sm:$0xf]
    %v258 = vld [vmem:[#allocation5 + $0x340] sm:$0xf]
    %v259 = vld [vmem:[#allocation5 + $0x344] sm:$0xf]
    %v260 = vld [vmem:[#allocation5 + $0x348] sm:$0xf]
    %v261 = vld [vmem:[#allocation5 + $0x34c] sm:$0xf]
    %v262 = vld [vmem:[#allocation5 + $0x350] sm:$0xf]
    %v263 = vld [vmem:[#allocation5 + $0x354] sm:$0xf]
    %v264 = vld [vmem:[#allocation5 + $0x358] sm:$0xf]
    %v265 = vld [vmem:[#allocation5 + $0x35c] sm:$0xf]
    %v266 = vld [vmem:[#allocation5 + $0x360] sm:$0xf]
    %v267 = vld [vmem:[#allocation5 + $0x364] sm:$0xf]
    %v268 = vld [vmem:[#allocation5 + $0x368] sm:$0xf]
    %v269 = vld [vmem:[#allocation5 + $0x36c] sm:$0xf]
    %v270 = vld [vmem:[#allocation5 + $0x370] sm:$0xf]
    %v271 = vld [vmem:[#allocation5 + $0x374] sm:$0xf]
    %v272 = vld [vmem:[#allocation5 + $0x378] sm:$0xf]
    %v273 = vld [vmem:[#allocation5 + $0x37c] sm:$0xf]
    %v274 = vld [vmem:[#allocation5 + $0x380] sm:$0xf]
    %v275 = vld [vmem:[#allocation5 + $0x384] sm:$0xf]
    %v276 = vld [vmem:[#allocation5 + $0x388] sm:$0xf]
    %v277 = vld [vmem:[#allocation5 + $0x38c] sm:$0xf]
    %v278 = vld [vmem:[#allocation5 + $0x390] sm:$0xf]
    %v279 = vld [vmem:[#allocation5 + $0x394] sm:$0xf]
    %v280 = vld [vmem:[#allocation5 + $0x398] sm:$0xf]
    %v281 = vld [vmem:[#allocation5 + $0x39c] sm:$0xf]
    %v282 = vld [vmem:[#allocation5 + $0x3a0] sm:$0xf]
    %v283 = vld [vmem:[#allocation5 + $0x3a4] sm:$0xf]
    %v284 = vld [vmem:[#allocation5 + $0x3a8] sm:$0xf]
    %v285 = vld [vmem:[#allocation5 + $0x3ac] sm:$0xf]
    %v286 = vld [vmem:[#allocation5 + $0x3b0] sm:$0xf]
    %v287 = vld [vmem:[#allocation5 + $0x3b4] sm:$0xf]
    %v288 = vld [vmem:[#allocation5 + $0x3b8] sm:$0xf]
    %v289 = vld [vmem:[#allocation5 + $0x3bc] sm:$0xf]
    %v290 = vld [vmem:[#allocation5 + $0x3c0] sm:$0xf]
    %v291 = vld [vmem:[#allocation5 + $0x3c4] sm:$0xf]
    %v292 = vld [vmem:[#allocation5 + $0x3c8] sm:$0xf]
    %v293 = vld [vmem:[#allocation5 + $0x3cc] sm:$0xf]
    %v294 = vld [vmem:[#allocation5 + $0x3d0] sm:$0xf]
    %v295 = vld [vmem:[#allocation5 + $0x3d4] sm:$0xf]
    %v296 = vld [vmem:[#allocation5 + $0x3d8] sm:$0xf]
    %v297 = vld [vmem:[#allocation5 + $0x3dc] sm:$0xf]
    %v298 = vld [vmem:[#allocation5 + $0x3e0] sm:$0xf]
    %v299 = vld [vmem:[#allocation5 + $0x3e4] sm:$0xf]
    %v300 = vld [vmem:[#allocation5 + $0x3e8] sm:$0xf]
    %v301 = vld [vmem:[#allocation5 + $0x3ec] sm:$0xf]
    %v302 = vld [vmem:[#allocation5 + $0x3f0] sm:$0xf]
    %v303 = vld [vmem:[#allocation5 + $0x3f4] sm:$0xf]
    %v304 = vld [vmem:[#allocation5 + $0x3f8] sm:$0xf]
    %v305 = vld [vmem:[#allocation5 + $0x3fc] sm:$0xf]
    %v306 = vld [vmem:[%s2] sm:$0x1]
    %v307 = vunpack.c.l.bf16 %v306
    %v308 = vlaneseq
    %v309 = vshrl.u32 %v308, 7
    %v310 = vsub.s32 0, %v309
    %v311 = vrot.slane %v307, %v310
    %v320 = vunpack.c.l.b16 %v42
    %v321 = vunpack.c.h.b16 %v42
    %v322 = vunpack.c.l.b16 %v43
    %v323 = vunpack.c.h.b16 %v43
    %v324 = vunpack.c.l.b16 %v44
    %v325 = vunpack.c.h.b16 %v44
    %v326 = vunpack.c.l.b16 %v45
    %v327 = vunpack.c.h.b16 %v45
    %v328 = vunpack.c.l.b16 %v46
    %v329 = vunpack.c.h.b16 %v46
    %v330 = vunpack.c.l.b16 %v47
    %v331 = vunpack.c.h.b16 %v47
    %v332 = vunpack.c.l.b16 %v48
    %v333 = vunpack.c.h.b16 %v48
    %v334 = vunpack.c.l.b16 %v49
    %v335 = vunpack.c.h.b16 %v49
    %v336 = vpack.c.b16 %v320, %v320
    %v337 = vpack.c.b16 %v321, %v321
    %v338 = vpack.c.b16 %v322, %v322
    %v339 = vpack.c.b16 %v323, %v323
    %v340 = vpack.c.b16 %v324, %v324
    %v341 = vpack.c.b16 %v325, %v325
    %v342 = vpack.c.b16 %v326, %v326
    %v343 = vpack.c.b16 %v327, %v327
    %v344 = vpack.c.b16 %v328, %v328
    %v345 = vpack.c.b16 %v329, %v329
    %v346 = vpack.c.b16 %v330, %v330
    %v347 = vpack.c.b16 %v331, %v331
    %v348 = vpack.c.b16 %v332, %v332
    %v349 = vpack.c.b16 %v333, %v333
    %v350 = vpack.c.b16 %v334, %v334
    %v351 = vpack.c.b16 %v335, %v335
    %v624 = vunpack.c.l.b16 %v50
    %v625 = vunpack.c.l.b16 %v51
    %v626 = vunpack.c.l.b16 %v52
    %v627 = vunpack.c.l.b16 %v53
    %v628 = vunpack.c.l.b16 %v54
    %v629 = vunpack.c.l.b16 %v55
    %v630 = vunpack.c.l.b16 %v56
    %v631 = vunpack.c.l.b16 %v57
    %v632 = vunpack.c.l.b16 %v58
    %v633 = vunpack.c.l.b16 %v59
    %v634 = vunpack.c.l.b16 %v60
    %v635 = vunpack.c.l.b16 %v61
    %v636 = vunpack.c.l.b16 %v62
    %v637 = vunpack.c.l.b16 %v63
    %v638 = vunpack.c.l.b16 %v64
    %v639 = vunpack.c.l.b16 %v65
    %v640 = vunpack.c.l.b16 %v66
    %v641 = vunpack.c.l.b16 %v67
    %v642 = vunpack.c.l.b16 %v68
    %v643 = vunpack.c.l.b16 %v69
    %v644 = vunpack.c.l.b16 %v70
    %v645 = vunpack.c.l.b16 %v71
    %v646 = vunpack.c.l.b16 %v72
    %v647 = vunpack.c.l.b16 %v73
    %v648 = vunpack.c.l.b16 %v74
    %v649 = vunpack.c.l.b16 %v75
    %v650 = vunpack.c.l.b16 %v76
    %v651 = vunpack.c.l.b16 %v77
    %v652 = vunpack.c.l.b16 %v78
    %v653 = vunpack.c.l.b16 %v79
    %v654 = vunpack.c.l.b16 %v80
    %v655 = vunpack.c.l.b16 %v81
    %v656 = vunpack.c.l.b16 %v82
    %v657 = vunpack.c.l.b16 %v83
    %v658 = vunpack.c.l.b16 %v84
    %v659 = vunpack.c.l.b16 %v85
    %v660 = vunpack.c.l.b16 %v86
    %v661 = vunpack.c.l.b16 %v87
    %v662 = vunpack.c.l.b16 %v88
    %v663 = vunpack.c.l.b16 %v89
    %v664 = vunpack.c.l.b16 %v90
    %v665 = vunpack.c.l.b16 %v91
    %v666 = vunpack.c.l.b16 %v92
    %v667 = vunpack.c.l.b16 %v93
    %v668 = vunpack.c.l.b16 %v94
    %v669 = vunpack.c.l.b16 %v95
    %v670 = vunpack.c.l.b16 %v96
    %v671 = vunpack.c.l.b16 %v97
    %v672 = vunpack.c.l.b16 %v98
    %v673 = vunpack.c.l.b16 %v99
    %v674 = vunpack.c.l.b16 %v100
    %v675 = vunpack.c.l.b16 %v101
    %v676 = vunpack.c.l.b16 %v102
    %v677 = vunpack.c.l.b16 %v103
    %v678 = vunpack.c.l.b16 %v104
    %v679 = vunpack.c.l.b16 %v105
    %v680 = vunpack.c.l.b16 %v106
    %v681 = vunpack.c.l.b16 %v107
    %v682 = vunpack.c.l.b16 %v108
    %v683 = vunpack.c.l.b16 %v109
    %v684 = vunpack.c.l.b16 %v110
    %v685 = vunpack.c.l.b16 %v111
    %v686 = vunpack.c.l.b16 %v112
    %v687 = vunpack.c.l.b16 %v113
    %v688 = vunpack.c.l.b16 %v114
    %v689 = vunpack.c.l.b16 %v115
    %v690 = vunpack.c.l.b16 %v116
    %v691 = vunpack.c.l.b16 %v117
    %v692 = vunpack.c.l.b16 %v118
    %v693 = vunpack.c.l.b16 %v119
    %v694 = vunpack.c.l.b16 %v120
    %v695 = vunpack.c.l.b16 %v121
    %v696 = vunpack.c.l.b16 %v122
    %v697 = vunpack.c.l.b16 %v123
    %v698 = vunpack.c.l.b16 %v124
    %v699 = vunpack.c.l.b16 %v125
    %v700 = vunpack.c.l.b16 %v126
    %v701 = vunpack.c.l.b16 %v127
    %v702 = vunpack.c.l.b16 %v128
    %v703 = vunpack.c.l.b16 %v129
    %v704 = vunpack.c.l.b16 %v130
    %v705 = vunpack.c.l.b16 %v131
    %v706 = vunpack.c.l.b16 %v132
    %v707 = vunpack.c.l.b16 %v133
    %v708 = vunpack.c.l.b16 %v134
    %v709 = vunpack.c.l.b16 %v135
    %v710 = vunpack.c.l.b16 %v136
    %v711 = vunpack.c.l.b16 %v137
    %v712 = vunpack.c.l.b16 %v138
    %v713 = vunpack.c.l.b16 %v139
    %v714 = vunpack.c.l.b16 %v140
    %v715 = vunpack.c.l.b16 %v141
    %v716 = vunpack.c.l.b16 %v142
    %v717 = vunpack.c.l.b16 %v143
    %v718 = vunpack.c.l.b16 %v144
    %v719 = vunpack.c.l.b16 %v145
    %v720 = vunpack.c.l.b16 %v146
    %v721 = vunpack.c.l.b16 %v147
    %v722 = vunpack.c.l.b16 %v148
    %v723 = vunpack.c.l.b16 %v149
    %v724 = vunpack.c.l.b16 %v150
    %v725 = vunpack.c.l.b16 %v151
    %v726 = vunpack.c.l.b16 %v152
    %v727 = vunpack.c.l.b16 %v153
    %v728 = vunpack.c.l.b16 %v154
    %v729 = vunpack.c.l.b16 %v155
    %v730 = vunpack.c.l.b16 %v156
    %v731 = vunpack.c.l.b16 %v157
    %v732 = vunpack.c.l.b16 %v158
    %v733 = vunpack.c.l.b16 %v159
    %v734 = vunpack.c.l.b16 %v160
    %v735 = vunpack.c.l.b16 %v161
    %v736 = vunpack.c.l.b16 %v162
    %v737 = vunpack.c.l.b16 %v163
    %v738 = vunpack.c.l.b16 %v164
    %v739 = vunpack.c.l.b16 %v165
    %v740 = vunpack.c.l.b16 %v166
    %v741 = vunpack.c.l.b16 %v167
    %v742 = vunpack.c.l.b16 %v168
    %v743 = vunpack.c.l.b16 %v169
    %v744 = vunpack.c.l.b16 %v170
    %v745 = vunpack.c.l.b16 %v171
    %v746 = vunpack.c.l.b16 %v172
    %v747 = vunpack.c.l.b16 %v173
    %v748 = vunpack.c.l.b16 %v174
    %v749 = vunpack.c.l.b16 %v175
    %v750 = vunpack.c.l.b16 %v176
    %v751 = vunpack.c.l.b16 %v177
    %v752 = vunpack.c.l.b16 %v178
    %v753 = vunpack.c.l.b16 %v179
    %v754 = vunpack.c.l.b16 %v180
    %v755 = vunpack.c.l.b16 %v181
    %v756 = vunpack.c.l.b16 %v182
    %v757 = vunpack.c.l.b16 %v183
    %v758 = vunpack.c.l.b16 %v184
    %v759 = vunpack.c.l.b16 %v185
    %v760 = vunpack.c.l.b16 %v186
    %v761 = vunpack.c.l.b16 %v187
    %v762 = vunpack.c.l.b16 %v188
    %v763 = vunpack.c.l.b16 %v189
    %v764 = vunpack.c.l.b16 %v190
    %v765 = vunpack.c.l.b16 %v191
    %v766 = vunpack.c.l.b16 %v192
    %v767 = vunpack.c.l.b16 %v193
    %v768 = vunpack.c.l.b16 %v194
    %v769 = vunpack.c.l.b16 %v195
    %v770 = vunpack.c.l.b16 %v196
    %v771 = vunpack.c.l.b16 %v197
    %v772 = vunpack.c.l.b16 %v198
    %v773 = vunpack.c.l.b16 %v199
    %v774 = vunpack.c.l.b16 %v200
    %v775 = vunpack.c.l.b16 %v201
    %v776 = vunpack.c.l.b16 %v202
    %v777 = vunpack.c.l.b16 %v203
    %v778 = vunpack.c.l.b16 %v204
    %v779 = vunpack.c.l.b16 %v205
    %v780 = vunpack.c.l.b16 %v206
    %v781 = vunpack.c.l.b16 %v207
    %v782 = vunpack.c.l.b16 %v208
    %v783 = vunpack.c.l.b16 %v209
    %v784 = vunpack.c.l.b16 %v210
    %v785 = vunpack.c.l.b16 %v211
    %v786 = vunpack.c.l.b16 %v212
    %v787 = vunpack.c.l.b16 %v213
    %v788 = vunpack.c.l.b16 %v214
    %v789 = vunpack.c.l.b16 %v215
    %v790 = vunpack.c.l.b16 %v216
    %v791 = vunpack.c.l.b16 %v217
    %v792 = vunpack.c.l.b16 %v218
    %v793 = vunpack.c.l.b16 %v219
    %v794 = vunpack.c.l.b16 %v220
    %v795 = vunpack.c.l.b16 %v221
    %v796 = vunpack.c.l.b16 %v222
    %v797 = vunpack.c.l.b16 %v223
    %v798 = vunpack.c.l.b16 %v224
    %v799 = vunpack.c.l.b16 %v225
    %v800 = vunpack.c.l.b16 %v226
    %v801 = vunpack.c.l.b16 %v227
    %v802 = vunpack.c.l.b16 %v228
    %v803 = vunpack.c.l.b16 %v229
    %v804 = vunpack.c.l.b16 %v230
    %v805 = vunpack.c.l.b16 %v231
    %v806 = vunpack.c.l.b16 %v232
    %v807 = vunpack.c.l.b16 %v233
    %v808 = vunpack.c.l.b16 %v234
    %v809 = vunpack.c.l.b16 %v235
    %v810 = vunpack.c.l.b16 %v236
    %v811 = vunpack.c.l.b16 %v237
    %v812 = vunpack.c.l.b16 %v238
    %v813 = vunpack.c.l.b16 %v239
    %v814 = vunpack.c.l.b16 %v240
    %v815 = vunpack.c.l.b16 %v241
    %v816 = vunpack.c.l.b16 %v242
    %v817 = vunpack.c.l.b16 %v243
    %v818 = vunpack.c.l.b16 %v244
    %v819 = vunpack.c.l.b16 %v245
    %v820 = vunpack.c.l.b16 %v246
    %v821 = vunpack.c.l.b16 %v247
    %v822 = vunpack.c.l.b16 %v248
    %v823 = vunpack.c.l.b16 %v249
    %v824 = vunpack.c.l.b16 %v250
    %v825 = vunpack.c.l.b16 %v251
    %v826 = vunpack.c.l.b16 %v252
    %v827 = vunpack.c.l.b16 %v253
    %v828 = vunpack.c.l.b16 %v254
    %v829 = vunpack.c.l.b16 %v255
    %v830 = vunpack.c.l.b16 %v256
    %v831 = vunpack.c.l.b16 %v257
    %v832 = vunpack.c.l.b16 %v258
    %v833 = vunpack.c.l.b16 %v259
    %v834 = vunpack.c.l.b16 %v260
    %v835 = vunpack.c.l.b16 %v261
    %v836 = vunpack.c.l.b16 %v262
    %v837 = vunpack.c.l.b16 %v263
    %v838 = vunpack.c.l.b16 %v264
    %v839 = vunpack.c.l.b16 %v265
    %v840 = vunpack.c.l.b16 %v266
    %v841 = vunpack.c.l.b16 %v267
    %v842 = vunpack.c.l.b16 %v268
    %v843 = vunpack.c.l.b16 %v269
    %v844 = vunpack.c.l.b16 %v270
    %v845 = vunpack.c.l.b16 %v271
    %v846 = vunpack.c.l.b16 %v272
    %v847 = vunpack.c.l.b16 %v273
    %v848 = vunpack.c.l.b16 %v274
    %v849 = vunpack.c.l.b16 %v275
    %v850 = vunpack.c.l.b16 %v276
    %v851 = vunpack.c.l.b16 %v277
    %v852 = vunpack.c.l.b16 %v278
    %v853 = vunpack.c.l.b16 %v279
    %v854 = vunpack.c.l.b16 %v280
    %v855 = vunpack.c.l.b16 %v281
    %v856 = vunpack.c.l.b16 %v282
    %v857 = vunpack.c.l.b16 %v283
    %v858 = vunpack.c.l.b16 %v284
    %v859 = vunpack.c.l.b16 %v285
    %v860 = vunpack.c.l.b16 %v286
    %v861 = vunpack.c.l.b16 %v287
    %v862 = vunpack.c.l.b16 %v288
    %v863 = vunpack.c.l.b16 %v289
    %v864 = vunpack.c.l.b16 %v290
    %v865 = vunpack.c.l.b16 %v291
    %v866 = vunpack.c.l.b16 %v292
    %v867 = vunpack.c.l.b16 %v293
    %v868 = vunpack.c.l.b16 %v294
    %v869 = vunpack.c.l.b16 %v295
    %v870 = vunpack.c.l.b16 %v296
    %v871 = vunpack.c.l.b16 %v297
    %v872 = vunpack.c.l.b16 %v298
    %v873 = vunpack.c.l.b16 %v299
    %v874 = vunpack.c.l.b16 %v300
    %v875 = vunpack.c.l.b16 %v301
    %v876 = vunpack.c.l.b16 %v302
    %v877 = vunpack.c.l.b16 %v303
    %v878 = vunpack.c.l.b16 %v304
    %v879 = vunpack.c.l.b16 %v305
    %v880 = vpack.c.b16 %v625, %v624
    %v881 = vpack.c.b16 %v627, %v626
    %v882 = vpack.c.b16 %v629, %v628
    %v883 = vpack.c.b16 %v631, %v630
    %v884 = vpack.c.b16 %v633, %v632
    %v885 = vpack.c.b16 %v635, %v634
    %v886 = vpack.c.b16 %v637, %v636
    %v887 = vpack.c.b16 %v639, %v638
    %v888 = vpack.c.b16 %v641, %v640
    %v889 = vpack.c.b16 %v643, %v642
    %v890 = vpack.c.b16 %v645, %v644
    %v891 = vpack.c.b16 %v647, %v646
    %v892 = vpack.c.b16 %v649, %v648
    %v893 = vpack.c.b16 %v651, %v650
    %v894 = vpack.c.b16 %v653, %v652
    %v895 = vpack.c.b16 %v655, %v654
    %v896 = vpack.c.b16 %v657, %v656
    %v897 = vpack.c.b16 %v659, %v658
    %v898 = vpack.c.b16 %v661, %v660
    %v899 = vpack.c.b16 %v663, %v662
    %v900 = vpack.c.b16 %v665, %v664
    %v901 = vpack.c.b16 %v667, %v666
    %v902 = vpack.c.b16 %v669, %v668
    %v903 = vpack.c.b16 %v671, %v670
    %v904 = vpack.c.b16 %v673, %v672
    %v905 = vpack.c.b16 %v675, %v674
    %v906 = vpack.c.b16 %v677, %v676
    %v907 = vpack.c.b16 %v679, %v678
    %v908 = vpack.c.b16 %v681, %v680
    %v909 = vpack.c.b16 %v683, %v682
    %v910 = vpack.c.b16 %v685, %v684
    %v911 = vpack.c.b16 %v687, %v686
    %v912 = vpack.c.b16 %v689, %v688
    %v913 = vpack.c.b16 %v691, %v690
    %v914 = vpack.c.b16 %v693, %v692
    %v915 = vpack.c.b16 %v695, %v694
    %v916 = vpack.c.b16 %v697, %v696
    %v917 = vpack.c.b16 %v699, %v698
    %v918 = vpack.c.b16 %v701, %v700
    %v919 = vpack.c.b16 %v703, %v702
    %v920 = vpack.c.b16 %v705, %v704
    %v921 = vpack.c.b16 %v707, %v706
    %v922 = vpack.c.b16 %v709, %v708
    %v923 = vpack.c.b16 %v711, %v710
    %v924 = vpack.c.b16 %v713, %v712
    %v925 = vpack.c.b16 %v715, %v714
    %v926 = vpack.c.b16 %v717, %v716
    %v927 = vpack.c.b16 %v719, %v718
    %v928 = vpack.c.b16 %v721, %v720
    %v929 = vpack.c.b16 %v723, %v722
    %v930 = vpack.c.b16 %v725, %v724
    %v931 = vpack.c.b16 %v727, %v726
    %v932 = vpack.c.b16 %v729, %v728
    %v933 = vpack.c.b16 %v731, %v730
    %v934 = vpack.c.b16 %v733, %v732
    %v935 = vpack.c.b16 %v735, %v734
    %v936 = vpack.c.b16 %v737, %v736
    %v937 = vpack.c.b16 %v739, %v738
    %v938 = vpack.c.b16 %v741, %v740
    %v939 = vpack.c.b16 %v743, %v742
    %v940 = vpack.c.b16 %v745, %v744
    %v941 = vpack.c.b16 %v747, %v746
    %v942 = vpack.c.b16 %v749, %v748
    %v943 = vpack.c.b16 %v751, %v750
    %v944 = vpack.c.b16 %v753, %v752
    %v945 = vpack.c.b16 %v755, %v754
    %v946 = vpack.c.b16 %v757, %v756
    %v947 = vpack.c.b16 %v759, %v758
    %v948 = vpack.c.b16 %v761, %v760
    %v949 = vpack.c.b16 %v763, %v762
    %v950 = vpack.c.b16 %v765, %v764
    %v951 = vpack.c.b16 %v767, %v766
    %v952 = vpack.c.b16 %v769, %v768
    %v953 = vpack.c.b16 %v771, %v770
    %v954 = vpack.c.b16 %v773, %v772
    %v955 = vpack.c.b16 %v775, %v774
    %v956 = vpack.c.b16 %v777, %v776
    %v957 = vpack.c.b16 %v779, %v778
    %v958 = vpack.c.b16 %v781, %v780
    %v959 = vpack.c.b16 %v783, %v782
    %v960 = vpack.c.b16 %v785, %v784
    %v961 = vpack.c.b16 %v787, %v786
    %v962 = vpack.c.b16 %v789, %v788
    %v963 = vpack.c.b16 %v791, %v790
    %v964 = vpack.c.b16 %v793, %v792
    %v965 = vpack.c.b16 %v795, %v794
    %v966 = vpack.c.b16 %v797, %v796
    %v967 = vpack.c.b16 %v799, %v798
    %v968 = vpack.c.b16 %v801, %v800
    %v969 = vpack.c.b16 %v803, %v802
    %v970 = vpack.c.b16 %v805, %v804
    %v971 = vpack.c.b16 %v807, %v806
    %v972 = vpack.c.b16 %v809, %v808
    %v973 = vpack.c.b16 %v811, %v810
    %v974 = vpack.c.b16 %v813, %v812
    %v975 = vpack.c.b16 %v815, %v814
    %v976 = vpack.c.b16 %v817, %v816
    %v977 = vpack.c.b16 %v819, %v818
    %v978 = vpack.c.b16 %v821, %v820
    %v979 = vpack.c.b16 %v823, %v822
    %v980 = vpack.c.b16 %v825, %v824
    %v981 = vpack.c.b16 %v827, %v826
    %v982 = vpack.c.b16 %v829, %v828
    %v983 = vpack.c.b16 %v831, %v830
    %v984 = vpack.c.b16 %v833, %v832
    %v985 = vpack.c.b16 %v835, %v834
    %v986 = vpack.c.b16 %v837, %v836
    %v987 = vpack.c.b16 %v839, %v838
    %v988 = vpack.c.b16 %v841, %v840
    %v989 = vpack.c.b16 %v843, %v842
    %v990 = vpack.c.b16 %v845, %v844
    %v991 = vpack.c.b16 %v847, %v846
    %v992 = vpack.c.b16 %v849, %v848
    %v993 = vpack.c.b16 %v851, %v850
    %v994 = vpack.c.b16 %v853, %v852
    %v995 = vpack.c.b16 %v855, %v854
    %v996 = vpack.c.b16 %v857, %v856
    %v997 = vpack.c.b16 %v859, %v858
    %v998 = vpack.c.b16 %v861, %v860
    %v999 = vpack.c.b16 %v863, %v862
    %v1000 = vpack.c.b16 %v865, %v864
    %v1001 = vpack.c.b16 %v867, %v866
    %v1002 = vpack.c.b16 %v869, %v868
    %v1003 = vpack.c.b16 %v871, %v870
    %v1004 = vpack.c.b16 %v873, %v872
    %v1005 = vpack.c.b16 %v875, %v874
    %v1006 = vpack.c.b16 %v877, %v876
    %v1007 = vpack.c.b16 %v879, %v878
    %1136 = vmatprep.subr.bf16.mxu0 0
    %1137 = vmatpush1.bf16.msra.mxu0 %v880
    %1138 = vmatprep.subr.bf16.mxu0 0
    %1139 = vmatpush1.bf16.msra.mxu0 %v881
    %1140 = vmatprep.subr.bf16.mxu0 0
    %1141 = vmatpush1.bf16.msra.mxu0 %v882
    %1142 = vmatprep.subr.bf16.mxu0 0
    %1143 = vmatpush1.bf16.msra.mxu0 %v883
    %1144 = vmatprep.subr.bf16.mxu0 0
    %1145 = vmatpush1.bf16.msra.mxu0 %v884
    %1146 = vmatprep.subr.bf16.mxu0 0
    %1147 = vmatpush1.bf16.msra.mxu0 %v885
    %1148 = vmatprep.subr.bf16.mxu0 0
    %1149 = vmatpush1.bf16.msra.mxu0 %v886
    %1150 = vmatprep.subr.bf16.mxu0 0
    %1151 = vmatpush1.bf16.msra.mxu0 %v887
    %1152 = vmatprep.subr.bf16.mxu0 0
    %1153 = vmatpush1.bf16.msra.mxu0 %v888
    %1154 = vmatprep.subr.bf16.mxu0 0
    %1155 = vmatpush1.bf16.msra.mxu0 %v889
    %1156 = vmatprep.subr.bf16.mxu0 0
    %1157 = vmatpush1.bf16.msra.mxu0 %v890
    %1158 = vmatprep.subr.bf16.mxu0 0
    %1159 = vmatpush1.bf16.msra.mxu0 %v891
    %1160 = vmatprep.subr.bf16.mxu0 0
    %1161 = vmatpush1.bf16.msra.mxu0 %v892
    %1162 = vmatprep.subr.bf16.mxu0 0
    %1163 = vmatpush1.bf16.msra.mxu0 %v893
    %1164 = vmatprep.subr.bf16.mxu0 0
    %1165 = vmatpush1.bf16.msra.mxu0 %v894
    %1166 = vmatprep.subr.bf16.mxu0 0
    %1167 = vmatpush1.bf16.msra.mxu0 %v895
    %1168 = vmatprep.mubr.bf16.mxu0 %v337
    %1169 = vmatmul.mubr.bf16.gmra.mrb[0].mxu0 %v336
    %v1170 = vpop.f32.mrb[0].mxu0
    %v1171 = vadd.f32 %v311, %v1170
    %v1172 = vpop.f32.mrb[0].mxu0
    %v1173 = vpop.f32.mrb[0].mxu0
    %v1174 = vpop.f32.mrb[0].mxu0
    %1175 = vdwg.mxu0
    %1176 = vmatprep.subr.bf16.mxu0 0
    %1177 = vmatpush1.bf16.msra.mxu0 %v896
    %1178 = vmatprep.subr.bf16.mxu0 0
    %1179 = vmatpush1.bf16.msra.mxu0 %v897
    %1180 = vmatprep.subr.bf16.mxu0 0
    %1181 = vmatpush1.bf16.msra.mxu0 %v898
    %1182 = vmatprep.subr.bf16.mxu0 0
    %1183 = vmatpush1.bf16.msra.mxu0 %v899
    %1184 = vmatprep.subr.bf16.mxu0 0
    %1185 = vmatpush1.bf16.msra.mxu0 %v900
    %1186 = vmatprep.subr.bf16.mxu0 0
    %1187 = vmatpush1.bf16.msra.mxu0 %v901
    %1188 = vmatprep.subr.bf16.mxu0 0
    %1189 = vmatpush1.bf16.msra.mxu0 %v902
    %1190 = vmatprep.subr.bf16.mxu0 0
    %1191 = vmatpush1.bf16.msra.mxu0 %v903
    %1192 = vmatprep.subr.bf16.mxu0 0
    %1193 = vmatpush1.bf16.msra.mxu0 %v904
    %1194 = vmatprep.subr.bf16.mxu0 0
    %1195 = vmatpush1.bf16.msra.mxu0 %v905
    %1196 = vmatprep.subr.bf16.mxu0 0
    %1197 = vmatpush1.bf16.msra.mxu0 %v906
    %1198 = vmatprep.subr.bf16.mxu0 0
    %1199 = vmatpush1.bf16.msra.mxu0 %v907
    %1200 = vmatprep.subr.bf16.mxu0 0
    %1201 = vmatpush1.bf16.msra.mxu0 %v908
    %1202 = vmatprep.subr.bf16.mxu0 0
    %1203 = vmatpush1.bf16.msra.mxu0 %v909
    %1204 = vmatprep.subr.bf16.mxu0 0
    %1205 = vmatpush1.bf16.msra.mxu0 %v910
    %1206 = vmatprep.subr.bf16.mxu0 0
    %1207 = vmatpush1.bf16.msra.mxu0 %v911
    %1208 = vmatprep.mubr.bf16.mxu0 %v339
    %1209 = vmatmul.mubr.bf16.gmra.mrb[0].mxu0 %v338
    %v1210 = vpop.f32.mrb[0].mxu0
    %v1211 = vadd.f32 %v1171, %v1210
    %v1212 = vpop.f32.mrb[0].mxu0
    %v1213 = vpop.f32.mrb[0].mxu0
    %v1214 = vpop.f32.mrb[0].mxu0
    %1215 = vdwg.mxu0
    %1216 = vmatprep.subr.bf16.mxu0 0
    %1217 = vmatpush1.bf16.msra.mxu0 %v912
    %1218 = vmatprep.subr.bf16.mxu0 0
    %1219 = vmatpush1.bf16.msra.mxu0 %v913
    %1220 = vmatprep.subr.bf16.mxu0 0
    %1221 = vmatpush1.bf16.msra.mxu0 %v914
    %1222 = vmatprep.subr.bf16.mxu0 0
    %1223 = vmatpush1.bf16.msra.mxu0 %v915
    %1224 = vmatprep.subr.bf16.mxu0 0
    %1225 = vmatpush1.bf16.msra.mxu0 %v916
    %1226 = vmatprep.subr.bf16.mxu0 0
    %1227 = vmatpush1.bf16.msra.mxu0 %v917
    %1228 = vmatprep.subr.bf16.mxu0 0
    %1229 = vmatpush1.bf16.msra.mxu0 %v918
    %1230 = vmatprep.subr.bf16.mxu0 0
    %1231 = vmatpush1.bf16.msra.mxu0 %v919
    %1232 = vmatprep.subr.bf16.mxu0 0
    %1233 = vmatpush1.bf16.msra.mxu0 %v920
    %1234 = vmatprep.subr.bf16.mxu0 0
    %1235 = vmatpush1.bf16.msra.mxu0 %v921
    %1236 = vmatprep.subr.bf16.mxu0 0
    %1237 = vmatpush1.bf16.msra.mxu0 %v922
    %1238 = vmatprep.subr.bf16.mxu0 0
    %1239 = vmatpush1.bf16.msra.mxu0 %v923
    %1240 = vmatprep.subr.bf16.mxu0 0
    %1241 = vmatpush1.bf16.msra.mxu0 %v924
    %1242 = vmatprep.subr.bf16.mxu0 0
    %1243 = vmatpush1.bf16.msra.mxu0 %v925
    %1244 = vmatprep.subr.bf16.mxu0 0
    %1245 = vmatpush1.bf16.msra.mxu0 %v926
    %1246 = vmatprep.subr.bf16.mxu0 0
    %1247 = vmatpush1.bf16.msra.mxu0 %v927
    %1248 = vmatprep.mubr.bf16.mxu0 %v341
    %1249 = vmatmul.mubr.bf16.gmra.mrb[0].mxu0 %v340
    %v1250 = vpop.f32.mrb[0].mxu0
    %v1251 = vadd.f32 %v1211, %v1250
    %v1252 = vpop.f32.mrb[0].mxu0
    %v1253 = vpop.f32.mrb[0].mxu0
    %v1254 = vpop.f32.mrb[0].mxu0
    %1255 = vdwg.mxu0
    %1256 = vmatprep.subr.bf16.mxu0 0
    %1257 = vmatpush1.bf16.msra.mxu0 %v928
    %1258 = vmatprep.subr.bf16.mxu0 0
    %1259 = vmatpush1.bf16.msra.mxu0 %v929
    %1260 = vmatprep.subr.bf16.mxu0 0
    %1261 = vmatpush1.bf16.msra.mxu0 %v930
    %1262 = vmatprep.subr.bf16.mxu0 0
    %1263 = vmatpush1.bf16.msra.mxu0 %v931
    %1264 = vmatprep.subr.bf16.mxu0 0
    %1265 = vmatpush1.bf16.msra.mxu0 %v932
    %1266 = vmatprep.subr.bf16.mxu0 0
    %1267 = vmatpush1.bf16.msra.mxu0 %v933
    %1268 = vmatprep.subr.bf16.mxu0 0
    %1269 = vmatpush1.bf16.msra.mxu0 %v934
    %1270 = vmatprep.subr.bf16.mxu0 0
    %1271 = vmatpush1.bf16.msra.mxu0 %v935
    %1272 = vmatprep.subr.bf16.mxu0 0
    %1273 = vmatpush1.bf16.msra.mxu0 %v936
    %1274 = vmatprep.subr.bf16.mxu0 0
    %1275 = vmatpush1.bf16.msra.mxu0 %v937
    %1276 = vmatprep.subr.bf16.mxu0 0
    %1277 = vmatpush1.bf16.msra.mxu0 %v938
    %1278 = vmatprep.subr.bf16.mxu0 0
    %1279 = vmatpush1.bf16.msra.mxu0 %v939
    %1280 = vmatprep.subr.bf16.mxu0 0
    %1281 = vmatpush1.bf16.msra.mxu0 %v940
    %1282 = vmatprep.subr.bf16.mxu0 0
    %1283 = vmatpush1.bf16.msra.mxu0 %v941
    %1284 = vmatprep.subr.bf16.mxu0 0
    %1285 = vmatpush1.bf16.msra.mxu0 %v942
    %1286 = vmatprep.subr.bf16.mxu0 0
    %1287 = vmatpush1.bf16.msra.mxu0 %v943
    %1288 = vmatprep.mubr.bf16.mxu0 %v343
    %1289 = vmatmul.mubr.bf16.gmra.mrb[0].mxu0 %v342
    %v1290 = vpop.f32.mrb[0].mxu0
    %v1291 = vadd.f32 %v1251, %v1290
    %v1292 = vpop.f32.mrb[0].mxu0
    %v1293 = vpop.f32.mrb[0].mxu0
    %v1294 = vpop.f32.mrb[0].mxu0
    %1295 = vdwg.mxu0
    %1296 = vmatprep.subr.bf16.mxu0 0
    %1297 = vmatpush1.bf16.msra.mxu0 %v944
    %1298 = vmatprep.subr.bf16.mxu0 0
    %1299 = vmatpush1.bf16.msra.mxu0 %v945
    %1300 = vmatprep.subr.bf16.mxu0 0
    %1301 = vmatpush1.bf16.msra.mxu0 %v946
    %1302 = vmatprep.subr.bf16.mxu0 0
    %1303 = vmatpush1.bf16.msra.mxu0 %v947
    %1304 = vmatprep.subr.bf16.mxu0 0
    %1305 = vmatpush1.bf16.msra.mxu0 %v948
    %1306 = vmatprep.subr.bf16.mxu0 0
    %1307 = vmatpush1.bf16.msra.mxu0 %v949
    %1308 = vmatprep.subr.bf16.mxu0 0
    %1309 = vmatpush1.bf16.msra.mxu0 %v950
    %1310 = vmatprep.subr.bf16.mxu0 0
    %1311 = vmatpush1.bf16.msra.mxu0 %v951
    %1312 = vmatprep.subr.bf16.mxu0 0
    %1313 = vmatpush1.bf16.msra.mxu0 %v952
    %1314 = vmatprep.subr.bf16.mxu0 0
    %1315 = vmatpush1.bf16.msra.mxu0 %v953
    %1316 = vmatprep.subr.bf16.mxu0 0
    %1317 = vmatpush1.bf16.msra.mxu0 %v954
    %1318 = vmatprep.subr.bf16.mxu0 0
    %1319 = vmatpush1.bf16.msra.mxu0 %v955
    %1320 = vmatprep.subr.bf16.mxu0 0
    %1321 = vmatpush1.bf16.msra.mxu0 %v956
    %1322 = vmatprep.subr.bf16.mxu0 0
    %1323 = vmatpush1.bf16.msra.mxu0 %v957
    %1324 = vmatprep.subr.bf16.mxu0 0
    %1325 = vmatpush1.bf16.msra.mxu0 %v958
    %1326 = vmatprep.subr.bf16.mxu0 0
    %1327 = vmatpush1.bf16.msra.mxu0 %v959
    %1328 = vmatprep.mubr.bf16.mxu0 %v345
    %1329 = vmatmul.mubr.bf16.gmra.mrb[0].mxu0 %v344
    %v1330 = vpop.f32.mrb[0].mxu0
    %v1331 = vadd.f32 %v1291, %v1330
    %v1332 = vpop.f32.mrb[0].mxu0
    %v1333 = vpop.f32.mrb[0].mxu0
    %v1334 = vpop.f32.mrb[0].mxu0
    %1335 = vdwg.mxu0
    %1336 = vmatprep.subr.bf16.mxu0 0
    %1337 = vmatpush1.bf16.msra.mxu0 %v960
    %1338 = vmatprep.subr.bf16.mxu0 0
    %1339 = vmatpush1.bf16.msra.mxu0 %v961
    %1340 = vmatprep.subr.bf16.mxu0 0
    %1341 = vmatpush1.bf16.msra.mxu0 %v962
    %1342 = vmatprep.subr.bf16.mxu0 0
    %1343 = vmatpush1.bf16.msra.mxu0 %v963
    %1344 = vmatprep.subr.bf16.mxu0 0
    %1345 = vmatpush1.bf16.msra.mxu0 %v964
    %1346 = vmatprep.subr.bf16.mxu0 0
    %1347 = vmatpush1.bf16.msra.mxu0 %v965
    %1348 = vmatprep.subr.bf16.mxu0 0
    %1349 = vmatpush1.bf16.msra.mxu0 %v966
    %1350 = vmatprep.subr.bf16.mxu0 0
    %1351 = vmatpush1.bf16.msra.mxu0 %v967
    %1352 = vmatprep.subr.bf16.mxu0 0
    %1353 = vmatpush1.bf16.msra.mxu0 %v968
    %1354 = vmatprep.subr.bf16.mxu0 0
    %1355 = vmatpush1.bf16.msra.mxu0 %v969
    %1356 = vmatprep.subr.bf16.mxu0 0
    %1357 = vmatpush1.bf16.msra.mxu0 %v970
    %1358 = vmatprep.subr.bf16.mxu0 0
    %1359 = vmatpush1.bf16.msra.mxu0 %v971
    %1360 = vmatprep.subr.bf16.mxu0 0
    %1361 = vmatpush1.bf16.msra.mxu0 %v972
    %1362 = vmatprep.subr.bf16.mxu0 0
    %1363 = vmatpush1.bf16.msra.mxu0 %v973
    %1364 = vmatprep.subr.bf16.mxu0 0
    %1365 = vmatpush1.bf16.msra.mxu0 %v974
    %1366 = vmatprep.subr.bf16.mxu0 0
    %1367 = vmatpush1.bf16.msra.mxu0 %v975
    %1368 = vmatprep.mubr.bf16.mxu0 %v347
    %1369 = vmatmul.mubr.bf16.gmra.mrb[0].mxu0 %v346
    %v1370 = vpop.f32.mrb[0].mxu0
    %v1371 = vadd.f32 %v1331, %v1370
    %v1372 = vpop.f32.mrb[0].mxu0
    %v1373 = vpop.f32.mrb[0].mxu0
    %v1374 = vpop.f32.mrb[0].mxu0
    %1375 = vdwg.mxu0
    %1376 = vmatprep.subr.bf16.mxu0 0
    %1377 = vmatpush1.bf16.msra.mxu0 %v976
    %1378 = vmatprep.subr.bf16.mxu0 0
    %1379 = vmatpush1.bf16.msra.mxu0 %v977
    %1380 = vmatprep.subr.bf16.mxu0 0
    %1381 = vmatpush1.bf16.msra.mxu0 %v978
    %1382 = vmatprep.subr.bf16.mxu0 0
    %1383 = vmatpush1.bf16.msra.mxu0 %v979
    %1384 = vmatprep.subr.bf16.mxu0 0
    %1385 = vmatpush1.bf16.msra.mxu0 %v980
    %1386 = vmatprep.subr.bf16.mxu0 0
    %1387 = vmatpush1.bf16.msra.mxu0 %v981
    %1388 = vmatprep.subr.bf16.mxu0 0
    %1389 = vmatpush1.bf16.msra.mxu0 %v982
    %1390 = vmatprep.subr.bf16.mxu0 0
    %1391 = vmatpush1.bf16.msra.mxu0 %v983
    %1392 = vmatprep.subr.bf16.mxu0 0
    %1393 = vmatpush1.bf16.msra.mxu0 %v984
    %1394 = vmatprep.subr.bf16.mxu0 0
    %1395 = vmatpush1.bf16.msra.mxu0 %v985
    %1396 = vmatprep.subr.bf16.mxu0 0
    %1397 = vmatpush1.bf16.msra.mxu0 %v986
    %1398 = vmatprep.subr.bf16.mxu0 0
    %1399 = vmatpush1.bf16.msra.mxu0 %v987
    %1400 = vmatprep.subr.bf16.mxu0 0
    %1401 = vmatpush1.bf16.msra.mxu0 %v988
    %1402 = vmatprep.subr.bf16.mxu0 0
    %1403 = vmatpush1.bf16.msra.mxu0 %v989
    %1404 = vmatprep.subr.bf16.mxu0 0
    %1405 = vmatpush1.bf16.msra.mxu0 %v990
    %1406 = vmatprep.subr.bf16.mxu0 0
    %1407 = vmatpush1.bf16.msra.mxu0 %v991
    %1408 = vmatprep.mubr.bf16.mxu0 %v349
    %1409 = vmatmul.mubr.bf16.gmra.mrb[0].mxu0 %v348
    %v1410 = vpop.f32.mrb[0].mxu0
    %v1411 = vadd.f32 %v1371, %v1410
    %v1412 = vpop.f32.mrb[0].mxu0
    %v1413 = vpop.f32.mrb[0].mxu0
    %v1414 = vpop.f32.mrb[0].mxu0
    %1415 = vdwg.mxu0
    %1416 = vmatprep.subr.bf16.mxu0 0
    %1417 = vmatpush1.bf16.msra.mxu0 %v992
    %1418 = vmatprep.subr.bf16.mxu0 0
    %1419 = vmatpush1.bf16.msra.mxu0 %v993
    %1420 = vmatprep.subr.bf16.mxu0 0
    %1421 = vmatpush1.bf16.msra.mxu0 %v994
    %1422 = vmatprep.subr.bf16.mxu0 0
    %1423 = vmatpush1.bf16.msra.mxu0 %v995
    %1424 = vmatprep.subr.bf16.mxu0 0
    %1425 = vmatpush1.bf16.msra.mxu0 %v996
    %1426 = vmatprep.subr.bf16.mxu0 0
    %1427 = vmatpush1.bf16.msra.mxu0 %v997
    %1428 = vmatprep.subr.bf16.mxu0 0
    %1429 = vmatpush1.bf16.msra.mxu0 %v998
    %1430 = vmatprep.subr.bf16.mxu0 0
    %1431 = vmatpush1.bf16.msra.mxu0 %v999
    %1432 = vmatprep.subr.bf16.mxu0 0
    %1433 = vmatpush1.bf16.msra.mxu0 %v1000
    %1434 = vmatprep.subr.bf16.mxu0 0
    %1435 = vmatpush1.bf16.msra.mxu0 %v1001
    %1436 = vmatprep.subr.bf16.mxu0 0
    %1437 = vmatpush1.bf16.msra.mxu0 %v1002
    %1438 = vmatprep.subr.bf16.mxu0 0
    %1439 = vmatpush1.bf16.msra.mxu0 %v1003
    %1440 = vmatprep.subr.bf16.mxu0 0
    %1441 = vmatpush1.bf16.msra.mxu0 %v1004
    %1442 = vmatprep.subr.bf16.mxu0 0
    %1443 = vmatpush1.bf16.msra.mxu0 %v1005
    %1444 = vmatprep.subr.bf16.mxu0 0
    %1445 = vmatpush1.bf16.msra.mxu0 %v1006
    %1446 = vmatprep.subr.bf16.mxu0 0
    %1447 = vmatpush1.bf16.msra.mxu0 %v1007
    %1448 = vmatprep.mubr.bf16.mxu0 %v351
    %1449 = vmatmul.mubr.bf16.gmra.mrb[0].mxu0 %v350
    %v1450 = vpop.f32.mrb[0].mxu0
    %v1451 = vadd.f32 %v1411, %v1450
    %v1452 = vpop.f32.mrb[0].mxu0
    %v1453 = vpop.f32.mrb[0].mxu0
    %v1454 = vpop.f32.mrb[0].mxu0
    %1455 = vdwg.mxu0
    %1456 = vst [vmem:[#allocation7] sm:$0xff] %v1451
    // Predicated region
    $region22: #{tpu_custom_call.1} parent=1 // pred_check
      _
    $region23: #{tpu_custom_call.1} parent=1 // pred_check_branch
      %1458 = sbr.rel (0) target = $region25
    $region24: #{tpu_custom_call.1} parent=1 // pred_region
      %s1460 = ssub.s32 128, 128
      %1461 = vsyncadd [#allocation4], %s1460
      %s1463 = sshll.u32 [#allocation7], 4
      %s1464 = int_to_ptr.vmem [resolvable:$true] %s1463
      %1466 = dma.vmem_to_hbm [thread:$0]  %s1464, 128, %s3, [#allocation4]
    $region25: #{tpu_custom_call.1} parent=1 // pred_fallthru
      _
    // Predicated region
    $region26: #{tpu_custom_call.1} parent=1 // pred_check
      _
    $region27: #{tpu_custom_call.1} parent=1 // pred_check_branch
      %1468 = sbr.rel (0) target = $region29
    $region28: #{tpu_custom_call.1} parent=1 // pred_region
      %1469 = dma.done [#allocation4], 128
    $region29: #{tpu_custom_call.1} parent=1 // pred_fallthru
      _
    %1470 = vsyncpa [#allocation3], 1
    %1471 = vsyncpa [#allocation6], 1
    %1472 = vsyncpa [#allocation4], 1

</llo_original>
